<compile_context>
chip_gen: v5e
topology: v5e:2x2
jax: 0.10.0
libtpu: 0.0.40
codegen_flags: <defaults>
</compile_context>

<pallas_src>
import functools

import numpy as np
import jax
import jax.numpy as jnp
from jax.experimental import pallas as pl
from jax.experimental.pallas import tpu as pltpu


def _gaussian_taps_1d(kernel_size: int, std: float) -> np.ndarray:
    """1-D taps g such that outer(g, g) equals
    scipy.ndimage.gaussian_filter(delta, sigma=std) on a KxK grid with the
    delta at the center (truncate=4.0).  Exact while the truncation radius
    fits inside the grid, which holds for the module's parameters."""
    radius = int(4.0 * std + 0.5)            # scipy default truncate = 4.0
    center = kernel_size // 2
    assert kernel_size % 2 == 1, "module semantics assume an odd kernel_size"
    assert radius <= center, "params chosen so scipy's reflect boundary never triggers"
    x = np.arange(-radius, radius + 1, dtype=np.float64)
    phi = np.exp(-0.5 / (std * std) * x * x)
    phi /= phi.sum()
    g = np.zeros(kernel_size, dtype=np.float64)
    g[center - radius:center + radius + 1] = phi
    return g


def _blur_matrix(n: int, taps: np.ndarray) -> np.ndarray:
    """(n, n) matrix M with (M @ v) == 1-D correlation of v with `taps` applied
    after PyTorch-style ReflectionPad(K//2) (edge sample not repeated).  Fusing
    the reflection pad here means the padded tensor never round-trips HBM."""
    K = taps.shape[0]
    pad = K // 2
    assert pad <= n - 1, "ReflectionPad requires pad <= dim - 1"
    M = np.zeros((n, n), dtype=np.float64)
    for o in range(n):
        for u in range(K):
            t = o + u - pad                   # index into the unpadded signal
            if t < 0:
                t = -t                        # reflect, no edge repeat
            elif t >= n:
                t = 2 * (n - 1) - t
            M[o, t] += taps[u]
    return M


def _blur_body(mh_ref, bdw_ref, x_ref, o_ref):
    # x_ref  : (H, pb*W)     -- pb independent planes interleaved on the lane axis
    # bdw_ref: (pb*W, pb*W)  -- block-diagonal, pb copies of M_w^T
    # mh_ref : (H, H)
    # Row (W) pass then column (H) pass, both on the MXU, f32 accumulation.
    t = jnp.dot(x_ref[...], bdw_ref[...], preferred_element_type=jnp.float32)
    y = jnp.dot(mh_ref[...], t, preferred_element_type=jnp.float32)
    o_ref[...] = y.astype(o_ref.dtype)


def _plan_blocks(num_planes: int, w: int):
    """Planes-per-block / grid size.  Smallest pb that makes the lane width a
    multiple of 128 (lane-dense stores, minimal block-diag waste); fallback is
    a single full-width step whose block equals the full array dims."""
    pb = max(1, -(-128 // w))                 # ceil(128 / W) planes per block
    if (pb * w) % 128 != 0:
        return num_planes, 1                  # fallback: one full-width step
    grid = max(1, -(-num_planes // pb))
    return pb, grid


@functools.partial(jax.jit, static_argnames=("kernel_size", "std"))
def blur_forward(x, kernel_size: int = 31, std: float = 3.0):
    """x: (N, C, H, W) float32.  Equivalent to
    Blurkernel('gaussian', kernel_size, std, channel=C).forward(x)."""
    N, C, H, W = x.shape
    B = N * C

    # Trace-time (host) constants: separable taps and fused pad+blur matrices.
    g = _gaussian_taps_1d(kernel_size, std)
    mh = jnp.asarray(_blur_matrix(H, g), dtype=x.dtype)            # (H, H)
    mw_t = _blur_matrix(W, g).T                                    # (W, W)

    pb, grid = _plan_blocks(B, W)
    bp = pb * grid
    bdw = jnp.asarray(np.kron(np.eye(pb), mw_t), dtype=x.dtype)    # (pb*W, pb*W)

    # Layout plumbing (wrapper-side, not compute): planes interleaved along the
    # lane axis -> (H, bp*W) slab so every kernel store is an unmasked vst.
    x3 = x.reshape(B, H, W)
    if bp > B:                                 # pad plane count to grid * pb
        x3 = jnp.concatenate([x3, jnp.zeros((bp - B, H, W), x.dtype)], axis=0)
    x2 = jnp.transpose(x3, (1, 0, 2)).reshape(H, bp * W)

    pbw = pb * W
    bytes_per = jnp.dtype(x.dtype).itemsize
    cost = pl.CostEstimate(
        flops=2 * grid * (H * pbw * pbw + H * H * pbw),
        transcendentals=0,
        bytes_accessed=bytes_per * (2 * H * bp * W + H * H + pbw * pbw),
    )

    y2 = pl.pallas_call(
        _blur_body,
        out_shape=jax.ShapeDtypeStruct((H, bp * W), x.dtype),
        grid=(grid,),
        in_specs=[
            pl.BlockSpec((H, H), lambda i: (0, 0)),               # M_h, resident
            pl.BlockSpec((pbw, pbw), lambda i: (0, 0)),           # block-diag M_w^T
            pl.BlockSpec((H, pbw), lambda i: (0, i)),             # pb planes / step
        ],
        out_specs=pl.BlockSpec((H, pbw), lambda i: (0, i)),
        compiler_params=pltpu.CompilerParams(
            dimension_semantics=("parallel",)),
        cost_estimate=cost,
    )(mh, bdw, x2)

    y = jnp.transpose(y2.reshape(H, bp, W), (1, 0, 2))[:B]
    return y.reshape(N, C, H, W)


def blur_reference_np(x_np: np.ndarray, kernel_size: int, std: float) -> np.ndarray:
    """Independent float64 numpy reference: reflection pad + depthwise conv
    with the scipy-style Gaussian kernel (matches the PyTorch module)."""
    g = _gaussian_taps_1d(kernel_size, std)
    k2d = np.outer(g, g)
    pad = kernel_size // 2
    xp = np.pad(x_np.astype(np.float64),
                ((0, 0), (0, 0), (pad, pad), (pad, pad)), mode="reflect")
    N, C, H, W = x_np.shape
    out = np.zeros((N, C, H, W), dtype=np.float64)
    for u in range(kernel_size):
        for v in range(kernel_size):
            out += k2d[u, v] * xp[:, :, u:u + H, v:v + W]
    return out


if __name__ == "__main__":
    # Module-consistent config: Blurkernel(blur_type='gaussian', kernel_size=31,
    # std=3.0, channel=4) applied to a (4, 4, 16, 16) input.  16 planes of 16x16
    # -> 2 lane-dense (16, 128) grid steps, one per TensorCore on v7x.
    kernel_size, std = 31, 3.0
    N, C, H, W = 4, 4, 16, 16
    x = jax.random.normal(jax.random.PRNGKey(0), (N, C, H, W), dtype=jnp.float32)

    y = jax.block_until_ready(blur_forward(x, kernel_size=kernel_size, std=std))
    assert y.shape == (N, C, H, W)

    y_ref = blur_reference_np(np.asarray(x), kernel_size, std)
    # Tolerance leaves headroom for the MXU's reduced-precision handling of f32
    # matmuls at default precision; real indexing/weight bugs are orders larger.
    np.testing.assert_allclose(np.asarray(y), y_ref, rtol=2e-3, atol=2e-4)

    print("KERNEL_OK")
</pallas_src>

<mosaic_0001>
module attributes {stable_mosaic.version = 11 : i64} {
  func.func @_blur_body(%arg0: i32, %arg1: memref<16x16xf32, #tpu.memory_space<vmem>>, %arg2: memref<128x128xf32, #tpu.memory_space<vmem>>, %arg3: memref<16x128xf32, #tpu.memory_space<vmem>>, %arg4: memref<16x128xf32, #tpu.memory_space<vmem>>) attributes {dimension_semantics = [#tpu.dimension_semantics<parallel>], iteration_bounds = array<i64: 2>, scalar_prefetch = 0 : i64, scratch_operands = 0 : i64, tpu.core_type = #tpu.core_type<tc>, window_params = [{pipeline_mode = #tpu.pipeline_mode<synchronous>, transform_indices = @transform_0, window_bounds = array<i64: 16, 16>}, {pipeline_mode = #tpu.pipeline_mode<synchronous>, transform_indices = @transform_1, window_bounds = array<i64: 128, 128>}, {transform_indices = @transform_2, window_bounds = array<i64: 16, 128>}, {transform_indices = @transform_3, window_bounds = array<i64: 16, 128>}]} {
    %c0 = arith.constant 0 : index
    %c0_0 = arith.constant 0 : index
    %0 = vector.load %arg3[%c0, %c0_0] : memref<16x128xf32, #tpu.memory_space<vmem>>, vector<16x128xf32>
    %c0_1 = arith.constant 0 : index
    %c0_2 = arith.constant 0 : index
    %1 = vector.load %arg2[%c0_1, %c0_2] : memref<128x128xf32, #tpu.memory_space<vmem>>, vector<128x128xf32>
    %cst = arith.constant dense<0.000000e+00> : vector<16x128xf32>
    %2 = tpu.matmul %0, %1, %cst {dimension_numbers = #tpu.dot_dimension_numbers<[1], [0], [0], [1], [0, 0, 1, 1], [], []>} : vector<16x128xf32>, vector<128x128xf32>, vector<16x128xf32> -> vector<16x128xf32>
    %c0_3 = arith.constant 0 : index
    %c0_4 = arith.constant 0 : index
    %3 = vector.load %arg1[%c0_3, %c0_4] : memref<16x16xf32, #tpu.memory_space<vmem>>, vector<16x16xf32>
    %cst_5 = arith.constant dense<0.000000e+00> : vector<16x128xf32>
    %4 = tpu.matmul %3, %2, %cst_5 {dimension_numbers = #tpu.dot_dimension_numbers<[1], [0], [0], [1], [0, 0, 1, 1], [], []>} : vector<16x16xf32>, vector<16x128xf32>, vector<16x128xf32> -> vector<16x128xf32>
    %c0_6 = arith.constant 0 : index
    %c0_7 = arith.constant 0 : index
    %5 = vector.load %arg4[%c0_6, %c0_7] : memref<16x128xf32, #tpu.memory_space<vmem>>, vector<16x128xf32>
    tpu.vector_store %arg4[%c0_6, %c0_7], %4 {strides = array<i32>} : memref<16x128xf32, #tpu.memory_space<vmem>>, vector<16x128xf32>,
    return
  }
  func.func @transform_0(%arg0: i32) -> (i32, i32) {
    %c0_i32 = arith.constant 0 : i32
    %c0_i32_0 = arith.constant 0 : i32
    %c0_i32_1 = arith.constant 0 : i32
    return %c0_i32, %c0_i32_0 : i32, i32
  }
  func.func @transform_1(%arg0: i32) -> (i32, i32) {
    %c0_i32 = arith.constant 0 : i32
    %c0_i32_0 = arith.constant 0 : i32
    %c0_i32_1 = arith.constant 0 : i32
    return %c0_i32, %c0_i32_0 : i32, i32
  }
  func.func @transform_2(%arg0: i32) -> (i32, i32) {
    %c0_i32 = arith.constant 0 : i32
    %c0_i32_0 = arith.constant 0 : i32
    return %c0_i32, %arg0 : i32, i32
  }
  func.func @transform_3(%arg0: i32) -> (i32, i32) {
    %c0_i32 = arith.constant 0 : i32
    %c0_i32_0 = arith.constant 0 : i32
    return %c0_i32, %arg0 : i32, i32
  }
}

</mosaic_0001>

<llo_original>
// kernel: blur_forward.1
$region0: #{blur_forward.1}
  #allocation0 [shape = 'u32[]', space=smem, size = 0x4, offset = 0x4, fixed_abs, tag = 'smem constant byte address 0x4 - core index']
  #allocation1 [shape = 'u32[72,128]{1,0:T(1,128)}', space=vmem, size = 0x9000, scoped, tag = 'internal scratch']
  %s0 = inlined_call_operand.vmem [shape: f32[16,16], index: 0, kind: input, shape index: {}]
  %s1 = inlined_call_operand.vmem [shape: f32[128,128], index: 1, kind: input, shape index: {}]
  %s2 = inlined_call_operand.vmem [shape: f32[16,256], index: 2, kind: input, shape index: {}]
  %s3 = inlined_call_operand.vmem [shape: f32[16,256], index: 3, kind: output, shape index: {}]
  %s4 = sld [smem:[#allocation0]]
  $region117: #{blur_forward.1} parent=0
    _
  %s6 = ssub.s32 1, %s4
  %s7 = scalar_select 0, %s6, %s4
  $region1: #{blur_forward.1} parent=0
    #allocation2 [shape = 'u8[16384]{0}', space=vmem, size = 0x4000, scoped, tag = 'input window, operand 2']
    #allocation3 [shape = 'u8[16384]{0}', space=vmem, size = 0x4000, scoped, tag = 'output window, operand 0']
    loop: start=0, step=1, limit=4
    $region2: #{blur_forward.1} parent=1 // loop_pre_header
      _
    $region3: #{blur_forward.1} parent=1 // loop_header
      %s9 = sphi 0, %s13
      %p10 = scmp.ge.s32.totalorder %s9, 4
      %s17 = sphi 0, %s17
      %s19 = sphi 0, %s17
      %s20 = sphi 0, %s19
      %s34 = sphi 0, %s20
      %s38 = sphi 0, %s38
      %s40 = sphi 0, %s38
      %s41 = sphi 0, %s40
      %s55 = sphi 0, %s41
      %s61 = sphi 0, %s63
      %s64 = sphi 0, %s61
      %s65 = sphi 0, %s64
      %s81 = sphi 0, %s65
      %s87 = sphi 0, %s89
      %s90 = sphi 0, %s87
      %s91 = sphi 0, %s90
      %s107 = sphi 0, %s91
    $region4: #{blur_forward.1} parent=1 // loop_header_branch
      %12 = sbr.rel (%p10) target = $region8
    $region5: #{blur_forward.1} parent=1 // loop_body
      %s14 = ssub.s32 %s9, 1
      %s15 = ssub.s32 %s9, 2
      %s16 = sadd.s32 %s9, 1
      %s18 = sadd.s32 %s17, 1
      %p21 = scmp.eq.s32.totalorder %s9, 1
      %p22 = scmp.ne.s32.totalorder %s17, %s19
      %p23 = scmp.eq.s32.totalorder %s9, 0
      %p24 = por %p22, %p23
      %p25 = scmp.ne.s32.totalorder %s17, %s19
      %p26 = scmp.eq.s32.totalorder %s14, 1
      %p27 = por %p25, %p26
      %p28 = scmp.ne.s32.totalorder %s19, %s20
      %p29 = scmp.eq.s32.totalorder %s14, 0
      %p30 = por %p28, %p29
      %p31 = scmp.ne.s32.totalorder %s19, %s20
      %p32 = scmp.eq.s32.totalorder %s15, 1
      %p33 = por %p31, %p32
      %p35 = scmp.ne.s32.totalorder %s20, %s34
      %p36 = scmp.eq.s32.totalorder %s15, 0
      %p37 = por %p35, %p36
      %s39 = sadd.s32 %s38, 1
      %p42 = scmp.eq.s32.totalorder %s9, 1
      %p43 = scmp.ne.s32.totalorder %s38, %s40
      %p44 = scmp.eq.s32.totalorder %s9, 0
      %p45 = por %p43, %p44
      %p46 = scmp.ne.s32.totalorder %s38, %s40
      %p47 = scmp.eq.s32.totalorder %s14, 1
      %p48 = por %p46, %p47
      %p49 = scmp.ne.s32.totalorder %s40, %s41
      %p50 = scmp.eq.s32.totalorder %s14, 0
      %p51 = por %p49, %p50
      %p52 = scmp.ne.s32.totalorder %s40, %s41
      %p53 = scmp.eq.s32.totalorder %s15, 1
      %p54 = por %p52, %p53
      %p56 = scmp.ne.s32.totalorder %s41, %s55
      %p57 = scmp.eq.s32.totalorder %s15, 0
      %p58 = por %p56, %p57
      %s59 = ssub.s32 %s9, %s16
      %p60 = scmp.eq.s32.totalorder %s59, 0
      %s62 = sadd.s32 %s61, 1
      %s63 = scalar_select %p60, %s61, %s62
      %p66 = pneg %p60
      %p67 = scmp.eq.s32.totalorder %s9, 1
      %p68 = por %p66, %p67
      %p69 = scmp.ne.s32.totalorder %s61, %s64
      %p70 = scmp.eq.s32.totalorder %s9, 0
      %p71 = por %p69, %p70
      %p72 = scmp.ne.s32.totalorder %s61, %s64
      %p73 = scmp.eq.s32.totalorder %s14, 1
      %p74 = por %p72, %p73
      %p75 = scmp.ne.s32.totalorder %s64, %s65
      %p76 = scmp.eq.s32.totalorder %s14, 0
      %p77 = por %p75, %p76
      %p78 = scmp.ne.s32.totalorder %s64, %s65
      %p79 = scmp.eq.s32.totalorder %s15, 1
      %p80 = por %p78, %p79
      %p82 = scmp.ne.s32.totalorder %s65, %s81
      %p83 = scmp.eq.s32.totalorder %s15, 0
      %p84 = por %p82, %p83
      %s85 = ssub.s32 %s9, %s16
      %p86 = scmp.eq.s32.totalorder %s85, 0
      %s88 = sadd.s32 %s87, 1
      %s89 = scalar_select %p86, %s87, %s88
      %p92 = pneg %p86
      %p93 = scmp.eq.s32.totalorder %s9, 1
      %p94 = por %p92, %p93
      %p95 = scmp.ne.s32.totalorder %s87, %s90
      %p96 = scmp.eq.s32.totalorder %s9, 0
      %p97 = por %p95, %p96
      %p98 = scmp.ne.s32.totalorder %s87, %s90
      %p99 = scmp.eq.s32.totalorder %s14, 1
      %p100 = por %p98, %p99
      %p101 = scmp.ne.s32.totalorder %s90, %s91
      %p102 = scmp.eq.s32.totalorder %s14, 0
      %p103 = por %p101, %p102
      %p104 = scmp.ne.s32.totalorder %s90, %s91
      %p105 = scmp.eq.s32.totalorder %s15, 1
      %p106 = por %p104, %p105
      %p108 = scmp.ne.s32.totalorder %s91, %s107
      %p109 = scmp.eq.s32.totalorder %s15, 0
      %p110 = por %p108, %p109
      %p111 = scmp.le.s32.totalorder 1, %s9
      %p112 = scmp.lt.s32.totalorder %s9, 3
      %p113 = pnand %p111, %p112
      %p114 = pneg %p113
      // Predicated region
      $region9: #{blur_forward.1} parent=5 // pred_check
        _
      $region10: #{blur_forward.1} parent=5 // pred_check_branch
        %116 = sbr.rel (%p113) target = $region12
      $region11: #{blur_forward.1} parent=5 // pred_region
        %s117 = ssub.s32 %s9, 1
        // Predicated region
        $region13: #{blur_forward.1} parent=11 // pred_check
          %p118 = pneg %p30
        $region14: #{blur_forward.1} parent=11 // pred_check_branch
          %120 = sbr.rel (%p118) target = $region16
        $region15: #{blur_forward.1} parent=11 // pred_region
          _
        $region16: #{blur_forward.1} parent=11 // pred_fallthru
          _
        // Predicated region
        $region17: #{blur_forward.1} parent=11 // pred_check
          %p121 = pneg %p51
        $region18: #{blur_forward.1} parent=11 // pred_check_branch
          %123 = sbr.rel (%p121) target = $region20
        $region19: #{blur_forward.1} parent=11 // pred_region
          _
        $region20: #{blur_forward.1} parent=11 // pred_fallthru
          _
      $region12: #{blur_forward.1} parent=5 // pred_fallthru
        _
      %p124 = scmp.lt.s32.totalorder %s9, 2
      // Predicated region
      $region21: #{blur_forward.1} parent=5 // pred_check
        %p125 = pneg %p124
      $region22: #{blur_forward.1} parent=5 // pred_check_branch
        %127 = sbr.rel (%p125) target = $region24
      $region23: #{blur_forward.1} parent=5 // pred_region
        // Predicated region
        $region25: #{blur_forward.1} parent=23 // pred_check
          %p128 = pneg %p71
        $region26: #{blur_forward.1} parent=23 // pred_check_branch
          %130 = sbr.rel (%p128) target = $region28
        $region27: #{blur_forward.1} parent=23 // pred_region
          %s131 = sand.u32 %s61, 1
          %s132 = sand.u32 %s61, 1
          %s133 = smul.addr %s132, 16
          %s134 = scalar_lea.vmem [#allocation2], %s133
          %s135 = smul.addr %s9, 8
          %s136 = scalar_lea.vmem %s2, %s135
          // Predicated region
          $region29: #{blur_forward.1} parent=27 // pred_check
            _
          $region30: #{blur_forward.1} parent=27 // pred_check_branch
            %138 = sbr.rel (0) target = $region32
          $region31: #{blur_forward.1} parent=27 // pred_region
            // Predicated region
            $region33: #{blur_forward.1} parent=31 // pred_check
              _
            $region34: #{blur_forward.1} parent=31 // pred_check_branch
              %140 = sbr.rel (0) target = $region36
            $region35: #{blur_forward.1} parent=31 // pred_region
              // Predicated region
              $region48: #{blur_forward.1} parent=35 // pred_check
                _
              $region49: #{blur_forward.1} parent=35 // pred_check_branch
                %158 = sbr.rel (0) target = $region51
              $region50: #{blur_forward.1} parent=35 // pred_region
                loop: start=0, step=1, limit=1
                $region52: #{blur_forward.1} parent=50 // loop_pre_header
                  _
                $region53: #{blur_forward.1} parent=50 // loop_header
                  %s160 = sphi 0, %s164
                  %p161 = scmp.ge.s32.totalorder %s160, 1
                  %s165 = sphi %s136, %s136
                  %s166 = sphi %s134, %s134
                $region54: #{blur_forward.1} parent=50 // loop_header_branch
                  %163 = sbr.rel (%p161) target = $region58
                $region55: #{blur_forward.1} parent=50 // loop_body
                  %v167 = vld [vmem:[%s165] sm:$0xff]
                  %168 = vst [vmem:[%s166] sm:$0xff] %v167
                  %v169 = vld [vmem:[%s165 + $0x10] sm:$0xff]
                  %170 = vst [vmem:[%s166 + $0x8] sm:$0xff] %v169
                $region56: #{blur_forward.1} parent=50 // loop_footer
                  %s164 = sadd.s32 1, %s160
                $region57: #{blur_forward.1} parent=50 // loop_footer_branch
                  %159 = sbr.rel target = $region53
                $region58: #{blur_forward.1} parent=50 // loop_exit
                  _
              $region51: #{blur_forward.1} parent=35 // pred_fallthru
                _
              // Predicated region
              $region59: #{blur_forward.1} parent=35 // pred_check
                _
              $region60: #{blur_forward.1} parent=35 // pred_check_branch
                %172 = sbr.rel target = $region62
              $region61: #{blur_forward.1} parent=35 // pred_region
                _
              $region62: #{blur_forward.1} parent=35 // pred_fallthru
                _
            $region36: #{blur_forward.1} parent=31 // pred_fallthru
              _
            // Predicated region
            $region37: #{blur_forward.1} parent=31 // pred_check
              _
            $region38: #{blur_forward.1} parent=31 // pred_check_branch
              %142 = sbr.rel target = $region40
            $region39: #{blur_forward.1} parent=31 // pred_region
              %s144 = ssub.s32 256, 1
              loop: start=0, step=1, limit=1
              $region41: #{blur_forward.1} parent=39 // loop_pre_header
                _
              $region42: #{blur_forward.1} parent=39 // loop_header
                %s146 = sphi 0, %s150
                %p147 = scmp.ge.s32.totalorder %s146, 1
                %s151 = sphi %s136, %s136
                %s152 = sphi %s134, %s134
              $region43: #{blur_forward.1} parent=39 // loop_header_branch
                %149 = sbr.rel (%p147) target = $region47
              $region44: #{blur_forward.1} parent=39 // loop_body
                %v153 = vld [vmem:[%s151] sm:%s144]
                %154 = vst [vmem:[%s152] sm:%s144] %v153
                %v155 = vld [vmem:[%s151 + $0x10] sm:%s144]
                %156 = vst [vmem:[%s152 + $0x8] sm:%s144] %v155
              $region45: #{blur_forward.1} parent=39 // loop_footer
                %s150 = sadd.s32 1, %s146
              $region46: #{blur_forward.1} parent=39 // loop_footer_branch
                %145 = sbr.rel target = $region42
              $region47: #{blur_forward.1} parent=39 // loop_exit
                _
            $region40: #{blur_forward.1} parent=31 // pred_fallthru
              _
          $region32: #{blur_forward.1} parent=27 // pred_fallthru
            _
          %173 = vnop
        $region28: #{blur_forward.1} parent=23 // pred_fallthru
          _
      $region24: #{blur_forward.1} parent=5 // pred_fallthru
        _
      %p174 = scmp.le.s32.totalorder 1, %s9
      %p175 = scmp.lt.s32.totalorder %s9, 3
      %p176 = pnand %p174, %p175
      %p177 = pneg %p176
      // Predicated region
      $region63: #{blur_forward.1} parent=5 // pred_check
        _
      $region64: #{blur_forward.1} parent=5 // pred_check_branch
        %179 = sbr.rel (%p176) target = $region66
      $region65: #{blur_forward.1} parent=5 // pred_region
        %s180 = ssub.s32 %s9, 1
        %s181 = sand.u32 %s64, 1
        %s182 = sand.u32 %s64, 1
        %s183 = smul.addr %s182, 16
        %s184 = scalar_lea.vmem [#allocation2], %s183
        // Predicated region
        $region67: #{blur_forward.1} parent=65 // pred_check
          %p185 = pneg %p77
        $region68: #{blur_forward.1} parent=65 // pred_check_branch
          %187 = sbr.rel (%p185) target = $region70
        $region69: #{blur_forward.1} parent=65 // pred_region
          _
        $region70: #{blur_forward.1} parent=65 // pred_fallthru
          _
        %p188 = pneg %p30
        %p189 = pneg %p27
        %p190 = pneg %p51
        %p191 = pneg %p48
        %s192 = sand.u32 %s64, 1
        %s193 = sand.u32 %s64, 1
        %s194 = smul.addr %s193, 16
        %s195 = scalar_lea.vmem [#allocation2], %s194
        %p196 = pneg %p77
        %p197 = pneg %p74
        %p198 = pneg %p103
        %p199 = pneg %p100
        %s200 = sand.u32 %s90, 1
        %s201 = sand.u32 %s90, 1
        %s202 = smul.addr %s201, 16
        %s203 = scalar_lea.vmem [#allocation3], %s202
        %v204 = vld [vmem:[%s184] sm:$0xff]
        %v205 = vld [vmem:[%s184 + $0x8] sm:$0xff]
        %v206 = vld [vmem:[%s1] sm:$0xff]
        %v207 = vld [vmem:[%s1 + $0x8] sm:$0xff]
        %v208 = vld [vmem:[%s1 + $0x10] sm:$0xff]
        %v209 = vld [vmem:[%s1 + $0x18] sm:$0xff]
        %v210 = vld [vmem:[%s1 + $0x20] sm:$0xff]
        %v211 = vld [vmem:[%s1 + $0x28] sm:$0xff]
        %v212 = vld [vmem:[%s1 + $0x30] sm:$0xff]
        %v213 = vld [vmem:[%s1 + $0x38] sm:$0xff]
        %v214 = vld [vmem:[%s1 + $0x40] sm:$0xff]
        %v215 = vld [vmem:[%s1 + $0x48] sm:$0xff]
        %v216 = vld [vmem:[%s1 + $0x50] sm:$0xff]
        %v217 = vld [vmem:[%s1 + $0x58] sm:$0xff]
        %v218 = vld [vmem:[%s1 + $0x60] sm:$0xff]
        %v219 = vld [vmem:[%s1 + $0x68] sm:$0xff]
        %v220 = vld [vmem:[%s1 + $0x70] sm:$0xff]
        %v221 = vld [vmem:[%s1 + $0x78] sm:$0xff]
        %222 = vmatpush.msra.mxu0 %v221
        %223 = vmatpush.msra.mxu0 %v220
        %224 = vmatpush.msra.mxu0 %v219
        %225 = vmatpush.msra.mxu0 %v218
        %226 = vmatpush.msra.mxu0 %v217
        %227 = vmatpush.msra.mxu0 %v216
        %228 = vmatpush.msra.mxu0 %v215
        %229 = vmatpush.msra.mxu0 %v214
        %230 = vmatpush.msra.mxu0 %v213
        %231 = vmatpush.msra.mxu0 %v212
        %232 = vmatpush.msra.mxu0 %v211
        %233 = vmatpush.msra.mxu0 %v210
        %234 = vmatpush.msra.mxu0 %v209
        %235 = vmatpush.msra.mxu0 %v208
        %236 = vmatpush.msra.mxu0 %v207
        %237 = vmatpush.msra.mxu0 %v206
        %238 = vmatmul.f32.gmra.mxu0 %v204
        %v239 = vpop.f32.mrf.mxu0
        %v240 = vadd.f32 0.0, %v239
        %241 = vmatmul.f32.gmra.mxu0 %v205
        %v242 = vpop.f32.mrf.mxu0
        %v243 = vadd.f32 0.0, %v242
        %244 = vdwg.mxu0
        %v245 = vld [vmem:[%s0] sm:$0xff]
        %v246 = vld [vmem:[%s0 + $0x8] sm:$0xff]
        %vm247 = vcmask 130048
        %v249 = vsel %vm247, %v245, 0
        %v252 = vsel %vm247, %v246, 0
        %254 = vmatpush.msra.mxu0 0.0
        %255 = vmatpush.msra.mxu0 0.0
        %256 = vmatpush.msra.mxu0 0.0
        %257 = vmatpush.msra.mxu0 0.0
        %258 = vmatpush.msra.mxu0 0.0
        %259 = vmatpush.msra.mxu0 0.0
        %260 = vmatpush.msra.mxu0 0.0
        %261 = vmatpush.msra.mxu0 0.0
        %262 = vmatpush.msra.mxu0 0.0
        %263 = vmatpush.msra.mxu0 0.0
        %264 = vmatpush.msra.mxu0 0.0
        %265 = vmatpush.msra.mxu0 0.0
        %266 = vmatpush.msra.mxu0 0.0
        %267 = vmatpush.msra.mxu0 0.0
        %268 = vmatpush.msra.mxu0 %v243
        %269 = vmatpush.msra.mxu0 %v240
        %270 = vmatmul.f32.gmra.mxu0 %v249
        %v271 = vpop.f32.mrf.mxu0
        %v272 = vadd.f32 0.0, %v271
        %273 = vmatmul.f32.gmra.mxu0 %v252
        %v274 = vpop.f32.mrf.mxu0
        %v275 = vadd.f32 0.0, %v274
        %276 = vdwg.mxu0
        %277 = vst [vmem:[%s203] sm:$0xff] %v272
        %278 = vst [vmem:[%s203 + $0x8] sm:$0xff] %v275
        %s279 = sand.u32 %s90, 1
        %s280 = sand.u32 %s90, 1
        %s281 = smul.addr %s280, 16
        %s282 = scalar_lea.vmem [#allocation3], %s281
        // Predicated region
        $region71: #{blur_forward.1} parent=65 // pred_check
          %p283 = pneg %p100
        $region72: #{blur_forward.1} parent=65 // pred_check_branch
          %285 = sbr.rel (%p283) target = $region74
        $region73: #{blur_forward.1} parent=65 // pred_region
          %s286 = smul.addr %s14, 8
          %s287 = scalar_lea.vmem %s3, %s286
          // Predicated region
          $region75: #{blur_forward.1} parent=73 // pred_check
            _
          $region76: #{blur_forward.1} parent=73 // pred_check_branch
            %289 = sbr.rel (0) target = $region78
          $region77: #{blur_forward.1} parent=73 // pred_region
            // Predicated region
            $region79: #{blur_forward.1} parent=77 // pred_check
              _
            $region80: #{blur_forward.1} parent=77 // pred_check_branch
              %291 = sbr.rel (0) target = $region82
            $region81: #{blur_forward.1} parent=77 // pred_region
              // Predicated region
              $region94: #{blur_forward.1} parent=81 // pred_check
                _
              $region95: #{blur_forward.1} parent=81 // pred_check_branch
                %309 = sbr.rel (0) target = $region97
              $region96: #{blur_forward.1} parent=81 // pred_region
                loop: start=0, step=1, limit=1
                $region98: #{blur_forward.1} parent=96 // loop_pre_header
                  _
                $region99: #{blur_forward.1} parent=96 // loop_header
                  %s311 = sphi 0, %s315
                  %p312 = scmp.ge.s32.totalorder %s311, 1
                  %s316 = sphi %s282, %s282
                  %s317 = sphi %s287, %s287
                $region100: #{blur_forward.1} parent=96 // loop_header_branch
                  %314 = sbr.rel (%p312) target = $region104
                $region101: #{blur_forward.1} parent=96 // loop_body
                  %v318 = vld [vmem:[%s316] sm:$0xff]
                  %319 = vst [vmem:[%s317] sm:$0xff] %v318
                  %v320 = vld [vmem:[%s316 + $0x8] sm:$0xff]
                  %321 = vst [vmem:[%s317 + $0x10] sm:$0xff] %v320
                $region102: #{blur_forward.1} parent=96 // loop_footer
                  %s315 = sadd.s32 1, %s311
                $region103: #{blur_forward.1} parent=96 // loop_footer_branch
                  %310 = sbr.rel target = $region99
                $region104: #{blur_forward.1} parent=96 // loop_exit
                  _
              $region97: #{blur_forward.1} parent=81 // pred_fallthru
                _
              // Predicated region
              $region105: #{blur_forward.1} parent=81 // pred_check
                _
              $region106: #{blur_forward.1} parent=81 // pred_check_branch
                %323 = sbr.rel target = $region108
              $region107: #{blur_forward.1} parent=81 // pred_region
                _
              $region108: #{blur_forward.1} parent=81 // pred_fallthru
                _
            $region82: #{blur_forward.1} parent=77 // pred_fallthru
              _
            // Predicated region
            $region83: #{blur_forward.1} parent=77 // pred_check
              _
            $region84: #{blur_forward.1} parent=77 // pred_check_branch
              %293 = sbr.rel target = $region86
            $region85: #{blur_forward.1} parent=77 // pred_region
              %s295 = ssub.s32 256, 1
              loop: start=0, step=1, limit=1
              $region87: #{blur_forward.1} parent=85 // loop_pre_header
                _
              $region88: #{blur_forward.1} parent=85 // loop_header
                %s297 = sphi 0, %s301
                %p298 = scmp.ge.s32.totalorder %s297, 1
                %s302 = sphi %s282, %s282
                %s303 = sphi %s287, %s287
              $region89: #{blur_forward.1} parent=85 // loop_header_branch
                %300 = sbr.rel (%p298) target = $region93
              $region90: #{blur_forward.1} parent=85 // loop_body
                %v304 = vld [vmem:[%s302] sm:%s295]
                %305 = vst [vmem:[%s303] sm:%s295] %v304
                %v306 = vld [vmem:[%s302 + $0x8] sm:%s295]
                %307 = vst [vmem:[%s303 + $0x10] sm:%s295] %v306
              $region91: #{blur_forward.1} parent=85 // loop_footer
                %s301 = sadd.s32 1, %s297
              $region92: #{blur_forward.1} parent=85 // loop_footer_branch
                %296 = sbr.rel target = $region88
              $region93: #{blur_forward.1} parent=85 // loop_exit
                _
            $region86: #{blur_forward.1} parent=77 // pred_fallthru
              _
          $region78: #{blur_forward.1} parent=73 // pred_fallthru
            _
          %324 = vnop
        $region74: #{blur_forward.1} parent=65 // pred_fallthru
          _
      $region66: #{blur_forward.1} parent=5 // pred_fallthru
        _
      %p325 = scmp.le.s32.totalorder 2, %s9
      // Predicated region
      $region109: #{blur_forward.1} parent=5 // pred_check
        %p326 = pneg %p325
      $region110: #{blur_forward.1} parent=5 // pred_check_branch
        %328 = sbr.rel (%p326) target = $region112
      $region111: #{blur_forward.1} parent=5 // pred_region
        %s329 = ssub.s32 %s9, 2
        // Predicated region
        $region113: #{blur_forward.1} parent=111 // pred_check
          %p330 = pneg %p106
        $region114: #{blur_forward.1} parent=111 // pred_check_branch
          %332 = sbr.rel (%p330) target = $region116
        $region115: #{blur_forward.1} parent=111 // pred_region
          %s333 = sand.u32 %s91, 1
          %s334 = sand.u32 %s91, 1
          %s335 = smul.addr %s334, 16
          %s336 = scalar_lea.vmem [#allocation3], %s335
        $region116: #{blur_forward.1} parent=111 // pred_fallthru
          _
      $region112: #{blur_forward.1} parent=5 // pred_fallthru
        _
    $region6: #{blur_forward.1} parent=1 // loop_footer
      %s13 = sadd.s32 1, %s9
    $region7: #{blur_forward.1} parent=1 // loop_footer_branch
      %8 = sbr.rel target = $region3
    $region8: #{blur_forward.1} parent=1 // loop_exit
      _

</llo_original>
